<compile_context>
chip_gen: v7x
topology: tpu7x:2x2x1
jax: 0.10.0
libtpu: 0.0.40
codegen_flags: <defaults>
</compile_context>

<pallas_src>
import functools

import jax
import jax.numpy as jnp
from jax.experimental import pallas as pl
from jax.experimental.pallas import tpu as pltpu

BN_EPS = 1e-5
VMEM_LIMIT_BYTES = 32 * 1024 * 1024   # safe scoped budget on v5e / v6e / v7x
MAX_TILE_M = 2048                     # rows per M tile (multiple of 128)


def _round_up(x, m):
    return (x + m - 1) // m * m


# ------------------------------ Pallas kernels ----------------------------- #
def bn_stats_kernel(x_ref, w_ref, gamma_ref, beta_ref, stats_ref, *, inv_m):
    """Phase 1: accumulate per-channel sum / sum-of-squares of y = w @ x across
    M tiles; on the last tile fold BN affine into (scale, shift)."""
    i = pl.program_id(0)

    @pl.when(i == 0)
    def _init():
        stats_ref[...] = jnp.zeros_like(stats_ref)

    # (Cout, Cin) @ (Cin, tile_m) -> (Cout, tile_m); lane-dense along tile_m.
    y = jnp.dot(w_ref[...], x_ref[...], preferred_element_type=jnp.float32)
    stats_ref[:, 0:1] += jnp.sum(y, axis=1, keepdims=True)
    stats_ref[:, 1:2] += jnp.sum(y * y, axis=1, keepdims=True)

    @pl.when(i == pl.num_programs(0) - 1)
    def _finalize():
        mean = stats_ref[:, 0:1] * inv_m
        var = jnp.maximum(stats_ref[:, 1:2] * inv_m - mean * mean, 0.0)
        scale = gamma_ref[...] * jax.lax.rsqrt(var + BN_EPS)
        shift = beta_ref[...] - mean * scale
        stats_ref[:, 0:1] = scale
        stats_ref[:, 1:2] = shift


def bn_apply_kernel(x_ref, w_ref, stats_ref, o_ref):
    """Phase 2: y = w @ x, fused per-channel affine (scale, shift) + ReLU."""
    y = jnp.dot(w_ref[...], x_ref[...], preferred_element_type=jnp.float32)
    y = y * stats_ref[:, 0:1] + stats_ref[:, 1:2]
    o_ref[...] = jnp.maximum(y, 0.0).astype(o_ref.dtype)


def conv1x1_bn_relu_cm(x_cm, w, gamma, beta, *, max_tile=MAX_TILE_M):
    """1x1 conv (bias=False) + BatchNorm2d (batch stats, training mode) + ReLU.

    x_cm: (Cin, M) float32, channel-major flattened activations (M = N*H*W).
    w:    (Cout, Cin) PyTorch Conv2d weight with the 1x1 dims squeezed.
    Returns (Cout, M).
    """
    cin, m = x_cm.shape
    cout = w.shape[0]

    if m <= max_tile:
        tile_m, m_pad = m, m          # single tile == full array dims (allowed)
        x_p = x_cm
    else:
        tile_m = max_tile             # multiple of 128 -> lane-dense blocks
        m_pad = _round_up(m, tile_m)
        # zero columns contribute 0 to sum/sumsq -> stats stay exact
        x_p = jnp.pad(x_cm, ((0, 0), (0, m_pad - m)))
    nt = m_pad // tile_m

    g2 = gamma.reshape(cout, 1).astype(jnp.float32)
    b2 = beta.reshape(cout, 1).astype(jnp.float32)

    # ---- pass 1: global BN statistics (sequential reduction over M tiles) ----
    stats = pl.pallas_call(
        functools.partial(bn_stats_kernel, inv_m=1.0 / m),
        out_shape=jax.ShapeDtypeStruct((cout, 2), jnp.float32),
        grid=(nt,),
        in_specs=[
            pl.BlockSpec((cin, tile_m), lambda i: (0, i)),
            pl.BlockSpec((cout, cin), lambda i: (0, 0)),
            pl.BlockSpec((cout, 1), lambda i: (0, 0)),
            pl.BlockSpec((cout, 1), lambda i: (0, 0)),
        ],
        out_specs=pl.BlockSpec((cout, 2), lambda i: (0, 0)),
        compiler_params=pltpu.CompilerParams(
            dimension_semantics=("arbitrary",),
            vmem_limit_bytes=VMEM_LIMIT_BYTES),
    )(x_p, w, g2, b2)

    # ---- pass 2: normalize + affine + ReLU (fully parallel over M tiles) -----
    y_p = pl.pallas_call(
        bn_apply_kernel,
        out_shape=jax.ShapeDtypeStruct((cout, m_pad), x_cm.dtype),
        grid=(nt,),
        in_specs=[
            pl.BlockSpec((cin, tile_m), lambda i: (0, i)),
            pl.BlockSpec((cout, cin), lambda i: (0, 0)),
            pl.BlockSpec((cout, 2), lambda i: (0, 0)),
        ],
        out_specs=pl.BlockSpec((cout, tile_m), lambda i: (0, i)),
        compiler_params=pltpu.CompilerParams(
            dimension_semantics=("parallel",),
            vmem_limit_bytes=VMEM_LIMIT_BYTES),
    )(x_p, w, stats)

    return y_p if m_pad == m else y_p[:, :m]


# ------------------------------- JAX glue ---------------------------------- #
def avtn_block(x_cnhw, p):
    """Apply one conv1x1+BN+ReLU block to a (C, N, H, W) activation."""
    c, n, h, w = x_cnhw.shape
    y2d = conv1x1_bn_relu_cm(x_cnhw.reshape(c, n * h * w),
                             p["w"], p["gamma"], p["beta"])
    return y2d.reshape(p["w"].shape[0], n, h, w)


def interpolate_nearest_cnhw(x, out_shape):
    """F.interpolate(mode='nearest') on a (C, N, H, W) activation."""
    _, _, h, w = x.shape
    oh, ow = out_shape
    hi = (jnp.arange(oh) * h) // oh
    wi = (jnp.arange(ow) * w) // ow
    return x[:, :, hi[:, None], wi[None, :]]


def naive_avtn_forward(params, x_nchw, out_shape):
    """NaiveAVTN.forward with synthetic features/extra; NCHW in / NCHW out."""
    # one relayout at the entry; everything stays channel-major afterwards
    x = jnp.transpose(x_nchw, (1, 0, 2, 3))            # (C, N, H, W)

    # --- self.features(x): synthetic backbone -> OrderedDict of feature maps
    f0 = avtn_block(x, params["feat0"])
    f1 = avtn_block(f0[:, :, ::2, ::2], params["feat1"])
    feats = {"f0": f0, "f1": f1}
    y = list(feats.values())[-1]

    # --- F.interpolate(..., mode='nearest')
    y = interpolate_nearest_cnhw(y, out_shape)

    # --- adjust_layer: Conv2d(1x1, bias=False) + BatchNorm2d + ReLU
    y = avtn_block(y, params["adjust"])
    outputs = [y]

    # --- extra blocks (synthetic: stride-2 subsample + 1x1 conv + BN + ReLU)
    for blk in params["extra"]:
        y = avtn_block(y[:, :, ::2, ::2], blk)
        outputs.append(y)

    # one relayout per output at the exit, to match PyTorch's NCHW outputs
    return {str(i): jnp.transpose(v, (1, 0, 2, 3)) for i, v in enumerate(outputs)}


# ------------------------------ parameters --------------------------------- #
def make_block_params(key, cin, cout):
    k1, k2, k3 = jax.random.split(key, 3)
    return dict(
        w=jax.random.normal(k1, (cout, cin), jnp.float32) * 0.2,
        gamma=1.0 + 0.1 * jax.random.normal(k2, (cout,), jnp.float32),
        beta=0.1 * jax.random.normal(k3, (cout,), jnp.float32),
    )


def make_params(key, c_img, in_channels, out_channels, num_extra):
    ks = jax.random.split(key, 3 + num_extra)
    return dict(
        feat0=make_block_params(ks[0], c_img, in_channels),
        feat1=make_block_params(ks[1], in_channels, in_channels),
        adjust=make_block_params(ks[2], in_channels, out_channels),
        extra=[make_block_params(ks[3 + i], out_channels, out_channels)
               for i in range(num_extra)],
    )


# --------------------------- pure-JAX reference ----------------------------- #
def ref_conv1x1_bn_relu_nchw(x, w, gamma, beta):
    y = jnp.einsum("nchw,oc->nohw", x, w)
    mean = y.mean(axis=(0, 2, 3), keepdims=True)
    var = ((y - mean) ** 2).mean(axis=(0, 2, 3), keepdims=True)
    y = (y - mean) * jax.lax.rsqrt(var + BN_EPS)
    y = y * gamma[None, :, None, None] + beta[None, :, None, None]
    return jnp.maximum(y, 0.0)


def ref_interpolate_nearest_nchw(x, out_shape):
    _, _, h, w = x.shape
    oh, ow = out_shape
    hi = (jnp.arange(oh) * h) // oh
    wi = (jnp.arange(ow) * w) // ow
    return x[:, :, hi[:, None], wi[None, :]]


def ref_forward(params, x, out_shape):
    f0 = ref_conv1x1_bn_relu_nchw(x, **params["feat0"])
    f1 = ref_conv1x1_bn_relu_nchw(f0[:, :, ::2, ::2], **params["feat1"])
    feats = {"f0": f0, "f1": f1}
    y = list(feats.values())[-1]
    y = ref_interpolate_nearest_nchw(y, out_shape)
    y = ref_conv1x1_bn_relu_nchw(y, **params["adjust"])
    outputs = [y]
    for blk in params["extra"]:
        y = ref_conv1x1_bn_relu_nchw(y[:, :, ::2, ::2], **blk)
        outputs.append(y)
    return {str(i): v for i, v in enumerate(outputs)}


def ref_conv1x1_bn_relu_cm(x_cm, w, gamma, beta):
    y = w @ x_cm
    mean = y.mean(axis=1, keepdims=True)
    var = ((y - mean) ** 2).mean(axis=1, keepdims=True)
    y = (y - mean) * jax.lax.rsqrt(var + BN_EPS)
    y = y * gamma[:, None] + beta[:, None]
    return jnp.maximum(y, 0.0)


# ----------------------------------- main ----------------------------------- #
if __name__ == "__main__":
    key = jax.random.PRNGKey(0)
    kx, kp, ku = jax.random.split(key, 3)

    # --- unit check of the tiled / padded multi-tile path (nt > 1) -----------
    ku1, ku2, ku3, ku4 = jax.random.split(ku, 4)
    xu = jax.random.normal(ku1, (8, 640), jnp.float32)          # M=640, pad->768
    wu = 0.2 * jax.random.normal(ku2, (16, 8), jnp.float32)
    gu = 1.0 + 0.1 * jax.random.normal(ku3, (16,), jnp.float32)
    bu = 0.1 * jax.random.normal(ku4, (16,), jnp.float32)
    yu = jax.block_until_ready(
        conv1x1_bn_relu_cm(xu, wu, gu, bu, max_tile=256))        # 3 M-tiles
    yu_ref = ref_conv1x1_bn_relu_cm(xu, wu, gu, bu)
    assert yu.shape == yu_ref.shape
    err_u = float(jnp.max(jnp.abs(yu - yu_ref)))
    assert err_u < 2e-3, f"tiled-path mismatch: {err_u}"

    # --- full NaiveAVTN forward at small shapes -------------------------------
    # image (N=2, C=3, 16, 16); features -> in_channels=8,
    # adjust -> out_channels=16, out_shape=(8, 8), 2 extra blocks.
    N, C_IMG, H, W = 2, 3, 16, 16
    IN_CH, OUT_CH = 8, 16
    OUT_SHAPE = (8, 8)
    NUM_EXTRA = 2

    x = jax.random.normal(kx, (N, C_IMG, H, W), jnp.float32)
    params = make_params(kp, C_IMG, IN_CH, OUT_CH, NUM_EXTRA)

    fwd = jax.jit(functools.partial(naive_avtn_forward, out_shape=OUT_SHAPE))
    out = fwd(params, x)
    out = jax.tree_util.tree_map(jax.block_until_ready, out)

    # correctness check against a pure-JAX reference of the same forward
    ref = ref_forward(params, x, OUT_SHAPE)
    for k in out:
        assert out[k].shape == ref[k].shape, (k, out[k].shape, ref[k].shape)
        err = float(jnp.max(jnp.abs(out[k] - ref[k])))
        assert err < 2e-3, f"mismatch at output {k}: {err}"

    print("KERNEL_OK")
</pallas_src>

<mosaic_0001>
module attributes {stable_mosaic.version = 11 : i64} {
  func.func @bn_stats_kernel(%arg0: i32, %arg1: memref<8x256xf32, #tpu.memory_space<vmem>>, %arg2: memref<16x8xf32, #tpu.memory_space<vmem>>, %arg3: memref<16x1xf32, #tpu.memory_space<vmem>>, %arg4: memref<16x1xf32, #tpu.memory_space<vmem>>, %arg5: memref<16x2xf32, #tpu.memory_space<vmem>>) attributes {dimension_semantics = [#tpu.dimension_semantics<arbitrary>], iteration_bounds = array<i64: 3>, scalar_prefetch = 0 : i64, scratch_operands = 0 : i64, tpu.core_type = #tpu.core_type<tc>, window_params = [{transform_indices = @transform_0, window_bounds = array<i64: 8, 256>}, {pipeline_mode = #tpu.pipeline_mode<synchronous>, transform_indices = @transform_1, window_bounds = array<i64: 16, 8>}, {pipeline_mode = #tpu.pipeline_mode<synchronous>, transform_indices = @transform_2, window_bounds = array<i64: 16, 1>}, {pipeline_mode = #tpu.pipeline_mode<synchronous>, transform_indices = @transform_3, window_bounds = array<i64: 16, 1>}, {pipeline_mode = #tpu.pipeline_mode<synchronous>, transform_indices = @transform_4, window_bounds = array<i64: 16, 2>}]} {
    %c0_i32 = arith.constant 0 : i32
    %0 = arith.cmpi eq, %arg0, %c0_i32 : i32
    %1 = arith.extui %0 : i1 to i32
    %c0_i32_0 = arith.constant 0 : i32
    %2 = arith.cmpi ne, %1, %c0_i32_0 : i32
    scf.if %2 {
      %cst_14 = arith.constant 0.000000e+00 : f32
      %20 = vector.broadcast %cst_14 : f32 to vector<16x2xf32>
      %c0_15 = arith.constant 0 : index
      %c0_16 = arith.constant 0 : index
      %21 = vector.load %arg5[%c0_15, %c0_16] : memref<16x2xf32, #tpu.memory_space<vmem>>, vector<16x2xf32>
      tpu.vector_store %arg5[%c0_15, %c0_16], %20 {strides = array<i32>} : memref<16x2xf32, #tpu.memory_space<vmem>>, vector<16x2xf32>,
    } else {
    }
    %c0 = arith.constant 0 : index
    %c0_1 = arith.constant 0 : index
    %3 = vector.load %arg2[%c0, %c0_1] : memref<16x8xf32, #tpu.memory_space<vmem>>, vector<16x8xf32>
    %c0_2 = arith.constant 0 : index
    %c0_3 = arith.constant 0 : index
    %4 = vector.load %arg1[%c0_2, %c0_3] : memref<8x256xf32, #tpu.memory_space<vmem>>, vector<8x256xf32>
    %cst = arith.constant dense<0.000000e+00> : vector<16x256xf32>
    %5 = tpu.matmul %3, %4, %cst {dimension_numbers = #tpu.dot_dimension_numbers<[1], [0], [0], [1], [0, 0, 1, 1], [], []>} : vector<16x8xf32>, vector<8x256xf32>, vector<16x256xf32> -> vector<16x256xf32>
    %c0_4 = arith.constant 0 : index
    %c0_5 = arith.constant 0 : index
    %6 = vector.load %arg5[%c0_4, %c0_5] : memref<16x2xf32, #tpu.memory_space<vmem>>, vector<16x1xf32>
    %cst_6 = arith.constant dense<0.000000e+00> : vector<16xf32>
    %7 = vector.multi_reduction <add>, %5, %cst_6 [1] : vector<16x256xf32> to vector<16xf32>
    %8 = vector.shape_cast %7 : vector<16xf32> to vector<16x1xf32>
    %9 = arith.addf %6, %8 : vector<16x1xf32>
    %c0_7 = arith.constant 0 : index
    %c0_8 = arith.constant 0 : index
    %10 = vector.load %arg5[%c0_7, %c0_8] : memref<16x2xf32, #tpu.memory_space<vmem>>, vector<16x1xf32>
    tpu.vector_store %arg5[%c0_7, %c0_8], %9 {strides = array<i32>} : memref<16x2xf32, #tpu.memory_space<vmem>>, vector<16x1xf32>,
    %c0_9 = arith.constant 0 : index
    %c1 = arith.constant 1 : index
    %11 = vector.load %arg5[%c0_9, %c1] : memref<16x2xf32, #tpu.memory_space<vmem>>, vector<16x1xf32>
    %12 = arith.mulf %5, %5 : vector<16x256xf32>
    %cst_10 = arith.constant dense<0.000000e+00> : vector<16xf32>
    %13 = vector.multi_reduction <add>, %12, %cst_10 [1] : vector<16x256xf32> to vector<16xf32>
    %14 = vector.shape_cast %13 : vector<16xf32> to vector<16x1xf32>
    %15 = arith.addf %11, %14 : vector<16x1xf32>
    %c0_11 = arith.constant 0 : index
    %c1_12 = arith.constant 1 : index
    %16 = vector.load %arg5[%c0_11, %c1_12] : memref<16x2xf32, #tpu.memory_space<vmem>>, vector<16x1xf32>
    tpu.vector_store %arg5[%c0_11, %c1_12], %15 {strides = array<i32>} : memref<16x2xf32, #tpu.memory_space<vmem>>, vector<16x1xf32>,
    %c2_i32 = arith.constant 2 : i32
    %17 = arith.cmpi eq, %arg0, %c2_i32 : i32
    %18 = arith.extui %17 : i1 to i32
    %c0_i32_13 = arith.constant 0 : i32
    %19 = arith.cmpi ne, %18, %c0_i32_13 : i32
    scf.if %19 {
      %c0_14 = arith.constant 0 : index
      %c0_15 = arith.constant 0 : index
      %20 = vector.load %arg5[%c0_14, %c0_15] : memref<16x2xf32, #tpu.memory_space<vmem>>, vector<16x1xf32>
      %cst_16 = arith.constant 1.562500e-03 : f32
      %21 = vector.broadcast %cst_16 : f32 to vector<16x1xf32>
      %22 = arith.mulf %20, %21 : vector<16x1xf32>
      %c0_17 = arith.constant 0 : index
      %c1_18 = arith.constant 1 : index
      %23 = vector.load %arg5[%c0_17, %c1_18] : memref<16x2xf32, #tpu.memory_space<vmem>>, vector<16x1xf32>
      %cst_19 = arith.constant 1.562500e-03 : f32
      %24 = vector.broadcast %cst_19 : f32 to vector<16x1xf32>
      %25 = arith.mulf %23, %24 : vector<16x1xf32>
      %26 = arith.mulf %22, %22 : vector<16x1xf32>
      %27 = arith.subf %25, %26 : vector<16x1xf32>
      %cst_20 = arith.constant 0.000000e+00 : f32
      %28 = vector.broadcast %cst_20 : f32 to vector<16x1xf32>
      %29 = arith.maximumf %27, %28 : vector<16x1xf32>
      %c0_21 = arith.constant 0 : index
      %c0_22 = arith.constant 0 : index
      %30 = vector.load %arg3[%c0_21, %c0_22] : memref<16x1xf32, #tpu.memory_space<vmem>>, vector<16x1xf32>
      %cst_23 = arith.constant 9.99999974E-6 : f32
      %31 = vector.broadcast %cst_23 : f32 to vector<16x1xf32>
      %32 = arith.addf %29, %31 : vector<16x1xf32>
      %33 = math.rsqrt %32 : vector<16x1xf32>
      %34 = arith.mulf %30, %33 : vector<16x1xf32>
      %c0_24 = arith.constant 0 : index
      %c0_25 = arith.constant 0 : index
      %35 = vector.load %arg4[%c0_24, %c0_25] : memref<16x1xf32, #tpu.memory_space<vmem>>, vector<16x1xf32>
      %36 = arith.mulf %22, %34 : vector<16x1xf32>
      %37 = arith.subf %35, %36 : vector<16x1xf32>
      %c0_26 = arith.constant 0 : index
      %c0_27 = arith.constant 0 : index
      %38 = vector.load %arg5[%c0_26, %c0_27] : memref<16x2xf32, #tpu.memory_space<vmem>>, vector<16x1xf32>
      tpu.vector_store %arg5[%c0_26, %c0_27], %34 {strides = array<i32>} : memref<16x2xf32, #tpu.memory_space<vmem>>, vector<16x1xf32>,
      %c0_28 = arith.constant 0 : index
      %c1_29 = arith.constant 1 : index
      %39 = vector.load %arg5[%c0_28, %c1_29] : memref<16x2xf32, #tpu.memory_space<vmem>>, vector<16x1xf32>
      tpu.vector_store %arg5[%c0_28, %c1_29], %37 {strides = array<i32>} : memref<16x2xf32, #tpu.memory_space<vmem>>, vector<16x1xf32>,
    } else {
    }
    return
  }
  func.func @transform_0(%arg0: i32) -> (i32, i32) {
    %c0_i32 = arith.constant 0 : i32
    %c0_i32_0 = arith.constant 0 : i32
    return %c0_i32, %arg0 : i32, i32
  }
  func.func @transform_1(%arg0: i32) -> (i32, i32) {
    %c0_i32 = arith.constant 0 : i32
    %c0_i32_0 = arith.constant 0 : i32
    %c0_i32_1 = arith.constant 0 : i32
    return %c0_i32, %c0_i32_0 : i32, i32
  }
  func.func @transform_2(%arg0: i32) -> (i32, i32) {
    %c0_i32 = arith.constant 0 : i32
    %c0_i32_0 = arith.constant 0 : i32
    %c0_i32_1 = arith.constant 0 : i32
    return %c0_i32, %c0_i32_0 : i32, i32
  }
  func.func @transform_3(%arg0: i32) -> (i32, i32) {
    %c0_i32 = arith.constant 0 : i32
    %c0_i32_0 = arith.constant 0 : i32
    %c0_i32_1 = arith.constant 0 : i32
    return %c0_i32, %c0_i32_0 : i32, i32
  }
  func.func @transform_4(%arg0: i32) -> (i32, i32) {
    %c0_i32 = arith.constant 0 : i32
    %c0_i32_0 = arith.constant 0 : i32
    %c0_i32_1 = arith.constant 0 : i32
    return %c0_i32, %c0_i32_0 : i32, i32
  }
}

</mosaic_0001>

<llo_original>
// kernel: tpu_custom_call.1
$region0: #{tpu_custom_call.1}
  #allocation0 [shape = 'u32[]', space=smem, size = 0x4, offset = 0x4, fixed_abs, tag = 'smem constant byte address 0x4 - core index']
  #allocation1 [shape = 'u32[144,128]{1,0:T(1,128)}', space=vmem, size = 0x12000, scoped, tag = 'internal scratch']
  %s0 = inlined_call_operand.vmem [shape: f32[8,768], index: 0, kind: input, shape index: {}]
  %s1 = inlined_call_operand.vmem [shape: f32[16,8], index: 1, kind: input, shape index: {}]
  %s2 = inlined_call_operand.vmem [shape: f32[16,1], index: 2, kind: input, shape index: {}]
  %s3 = inlined_call_operand.vmem [shape: f32[16,1], index: 3, kind: input, shape index: {}]
  %s4 = inlined_call_operand.vmem [shape: f32[16,2], index: 4, kind: output, shape index: {}]
  %s5 = sld [smem:[#allocation0]]
  $region57: #{tpu_custom_call.1} parent=0
    _
  %s7 = ssub.s32 1, %s5
  %s8 = scalar_select 0, %s7, %s5
  loop: start=0, step=1, limit=5
  $region2: #{tpu_custom_call.1} parent=0 // loop_pre_header
    _
  $region3: #{tpu_custom_call.1} parent=0 // loop_header
    %s10 = sphi 0, %s14
    %p11 = scmp.ge.s32.totalorder %s10, 5
    %s20 = sphi 0, %s22
    %s23 = sphi 0, %s20
    %s24 = sphi 0, %s23
    %s40 = sphi 0, %s24
    %s44 = sphi 0, %s44
    %s46 = sphi 0, %s44
    %s47 = sphi 0, %s46
    %s61 = sphi 0, %s47
    %s65 = sphi 0, %s65
    %s67 = sphi 0, %s65
    %s68 = sphi 0, %s67
    %s82 = sphi 0, %s68
    %s86 = sphi 0, %s86
    %s88 = sphi 0, %s86
    %s89 = sphi 0, %s88
    %s103 = sphi 0, %s89
    %s107 = sphi 0, %s107
    %s109 = sphi 0, %s107
    %s110 = sphi 0, %s109
    %s124 = sphi 0, %s110
  $region4: #{tpu_custom_call.1} parent=0 // loop_header_branch
    %13 = sbr.rel (%p11) target = $region8
  $region5: #{tpu_custom_call.1} parent=0 // loop_body
    %s15 = ssub.s32 %s10, 1
    %s16 = ssub.s32 %s10, 2
    %s17 = sadd.s32 %s10, 1
    %s18 = ssub.s32 %s10, %s17
    %p19 = scmp.eq.s32.totalorder %s18, 0
    %s21 = sadd.s32 %s20, 1
    %s22 = scalar_select %p19, %s20, %s21
    %p25 = pneg %p19
    %p26 = scmp.eq.s32.totalorder %s10, 2
    %p27 = por %p25, %p26
    %p28 = scmp.ne.s32.totalorder %s20, %s23
    %p29 = scmp.eq.s32.totalorder %s10, 0
    %p30 = por %p28, %p29
    %p31 = scmp.ne.s32.totalorder %s20, %s23
    %p32 = scmp.eq.s32.totalorder %s15, 2
    %p33 = por %p31, %p32
    %p34 = scmp.ne.s32.totalorder %s23, %s24
    %p35 = scmp.eq.s32.totalorder %s15, 0
    %p36 = por %p34, %p35
    %p37 = scmp.ne.s32.totalorder %s23, %s24
    %p38 = scmp.eq.s32.totalorder %s16, 2
    %p39 = por %p37, %p38
    %p41 = scmp.ne.s32.totalorder %s24, %s40
    %p42 = scmp.eq.s32.totalorder %s16, 0
    %p43 = por %p41, %p42
    %s45 = sadd.s32 %s44, 1
    %p48 = scmp.eq.s32.totalorder %s10, 2
    %p49 = scmp.ne.s32.totalorder %s44, %s46
    %p50 = scmp.eq.s32.totalorder %s10, 0
    %p51 = por %p49, %p50
    %p52 = scmp.ne.s32.totalorder %s44, %s46
    %p53 = scmp.eq.s32.totalorder %s15, 2
    %p54 = por %p52, %p53
    %p55 = scmp.ne.s32.totalorder %s46, %s47
    %p56 = scmp.eq.s32.totalorder %s15, 0
    %p57 = por %p55, %p56
    %p58 = scmp.ne.s32.totalorder %s46, %s47
    %p59 = scmp.eq.s32.totalorder %s16, 2
    %p60 = por %p58, %p59
    %p62 = scmp.ne.s32.totalorder %s47, %s61
    %p63 = scmp.eq.s32.totalorder %s16, 0
    %p64 = por %p62, %p63
    %s66 = sadd.s32 %s65, 1
    %p69 = scmp.eq.s32.totalorder %s10, 2
    %p70 = scmp.ne.s32.totalorder %s65, %s67
    %p71 = scmp.eq.s32.totalorder %s10, 0
    %p72 = por %p70, %p71
    %p73 = scmp.ne.s32.totalorder %s65, %s67
    %p74 = scmp.eq.s32.totalorder %s15, 2
    %p75 = por %p73, %p74
    %p76 = scmp.ne.s32.totalorder %s67, %s68
    %p77 = scmp.eq.s32.totalorder %s15, 0
    %p78 = por %p76, %p77
    %p79 = scmp.ne.s32.totalorder %s67, %s68
    %p80 = scmp.eq.s32.totalorder %s16, 2
    %p81 = por %p79, %p80
    %p83 = scmp.ne.s32.totalorder %s68, %s82
    %p84 = scmp.eq.s32.totalorder %s16, 0
    %p85 = por %p83, %p84
    %s87 = sadd.s32 %s86, 1
    %p90 = scmp.eq.s32.totalorder %s10, 2
    %p91 = scmp.ne.s32.totalorder %s86, %s88
    %p92 = scmp.eq.s32.totalorder %s10, 0
    %p93 = por %p91, %p92
    %p94 = scmp.ne.s32.totalorder %s86, %s88
    %p95 = scmp.eq.s32.totalorder %s15, 2
    %p96 = por %p94, %p95
    %p97 = scmp.ne.s32.totalorder %s88, %s89
    %p98 = scmp.eq.s32.totalorder %s15, 0
    %p99 = por %p97, %p98
    %p100 = scmp.ne.s32.totalorder %s88, %s89
    %p101 = scmp.eq.s32.totalorder %s16, 2
    %p102 = por %p100, %p101
    %p104 = scmp.ne.s32.totalorder %s89, %s103
    %p105 = scmp.eq.s32.totalorder %s16, 0
    %p106 = por %p104, %p105
    %s108 = sadd.s32 %s107, 1
    %p111 = scmp.eq.s32.totalorder %s10, 2
    %p112 = scmp.ne.s32.totalorder %s107, %s109
    %p113 = scmp.eq.s32.totalorder %s10, 0
    %p114 = por %p112, %p113
    %p115 = scmp.ne.s32.totalorder %s107, %s109
    %p116 = scmp.eq.s32.totalorder %s15, 2
    %p117 = por %p115, %p116
    %p118 = scmp.ne.s32.totalorder %s109, %s110
    %p119 = scmp.eq.s32.totalorder %s15, 0
    %p120 = por %p118, %p119
    %p121 = scmp.ne.s32.totalorder %s109, %s110
    %p122 = scmp.eq.s32.totalorder %s16, 2
    %p123 = por %p121, %p122
    %p125 = scmp.ne.s32.totalorder %s110, %s124
    %p126 = scmp.eq.s32.totalorder %s16, 0
    %p127 = por %p125, %p126
    %p128 = scmp.le.s32.totalorder 1, %s10
    %p129 = scmp.lt.s32.totalorder %s10, 4
    %p130 = pnand %p128, %p129
    %p131 = pneg %p130
    // Predicated region
    $region9: #{tpu_custom_call.1} parent=5 // pred_check
      _
    $region10: #{tpu_custom_call.1} parent=5 // pred_check_branch
      %133 = sbr.rel (%p130) target = $region12
    $region11: #{tpu_custom_call.1} parent=5 // pred_region
      %s134 = ssub.s32 %s10, 1
      // Predicated region
      $region13: #{tpu_custom_call.1} parent=11 // pred_check
        %p135 = pneg %p57
      $region14: #{tpu_custom_call.1} parent=11 // pred_check_branch
        %137 = sbr.rel (%p135) target = $region16
      $region15: #{tpu_custom_call.1} parent=11 // pred_region
        _
      $region16: #{tpu_custom_call.1} parent=11 // pred_fallthru
        _
      // Predicated region
      $region17: #{tpu_custom_call.1} parent=11 // pred_check
        %p138 = pneg %p78
      $region18: #{tpu_custom_call.1} parent=11 // pred_check_branch
        %140 = sbr.rel (%p138) target = $region20
      $region19: #{tpu_custom_call.1} parent=11 // pred_region
        _
      $region20: #{tpu_custom_call.1} parent=11 // pred_fallthru
        _
      // Predicated region
      $region21: #{tpu_custom_call.1} parent=11 // pred_check
        %p141 = pneg %p99
      $region22: #{tpu_custom_call.1} parent=11 // pred_check_branch
        %143 = sbr.rel (%p141) target = $region24
      $region23: #{tpu_custom_call.1} parent=11 // pred_region
        _
      $region24: #{tpu_custom_call.1} parent=11 // pred_fallthru
        _
    $region12: #{tpu_custom_call.1} parent=5 // pred_fallthru
      _
    %p144 = scmp.lt.s32.totalorder %s10, 3
    // Predicated region
    $region25: #{tpu_custom_call.1} parent=5 // pred_check
      %p145 = pneg %p144
    $region26: #{tpu_custom_call.1} parent=5 // pred_check_branch
      %147 = sbr.rel (%p145) target = $region28
    $region27: #{tpu_custom_call.1} parent=5 // pred_region
      // Predicated region
      $region29: #{tpu_custom_call.1} parent=27 // pred_check
        %p148 = pneg %p30
      $region30: #{tpu_custom_call.1} parent=27 // pred_check_branch
        %150 = sbr.rel (%p148) target = $region32
      $region31: #{tpu_custom_call.1} parent=27 // pred_region
        %s151 = smul.u32 2, %s10
        %p152 = scmp.lt.s32.totalorder %s151, 5
        %s153 = scalar_select %p152, %s151, 5
        %s154 = smul.addr %s153, 8
        %s155 = scalar_lea.vmem %s0, %s154
        %s156 = smul.u32 2, %s10
      $region32: #{tpu_custom_call.1} parent=27 // pred_fallthru
        _
    $region28: #{tpu_custom_call.1} parent=5 // pred_fallthru
      _
    %p157 = scmp.le.s32.totalorder 1, %s10
    %p158 = scmp.lt.s32.totalorder %s10, 4
    %p159 = pnand %p157, %p158
    %p160 = pneg %p159
    // Predicated region
    $region33: #{tpu_custom_call.1} parent=5 // pred_check
      _
    $region34: #{tpu_custom_call.1} parent=5 // pred_check_branch
      %162 = sbr.rel (%p159) target = $region36
    $region35: #{tpu_custom_call.1} parent=5 // pred_region
      %s163 = ssub.s32 %s10, 1
      %s164 = smul.u32 2, %s15
      %p165 = scmp.lt.s32.totalorder %s164, 5
      %s166 = scalar_select %p165, %s164, 5
      %s167 = smul.addr %s166, 8
      %s168 = scalar_lea.vmem %s0, %s167
      %p169 = pneg %p36
      %p170 = pneg %p33
      %p171 = pneg %p57
      %p172 = pneg %p54
      %p173 = pneg %p78
      %p174 = pneg %p75
      %p175 = pneg %p99
      %p176 = pneg %p96
      %p177 = pneg %p120
      %p178 = pneg %p117
      %s179 = smul.u32 2, %s15
      %p180 = scmp.lt.s32.totalorder %s179, 5
      %s181 = scalar_select %p180, %s179, 5
      %s182 = smul.addr %s181, 8
      %s183 = scalar_lea.vmem %s0, %s182
      %s184 = smul.u32 2, %s15
      %p185 = scmp.eq.s32.totalorder %s15, 0
      // Predicated region
      $region37: #{tpu_custom_call.1} parent=35 // pred_check
        %p186 = pneg %p185
      $region38: #{tpu_custom_call.1} parent=35 // pred_check_branch
        %188 = sbr.rel (%p186) target = $region40
      $region39: #{tpu_custom_call.1} parent=35 // pred_region
        %vm189 = vcmask 15360
        %190 = vst.msk [vmem:[%s4] sm:$0xff] %vm189, 0.0
        %191 = vst.msk [vmem:[%s4 + $0x8] sm:$0xff] %vm189, 0.0
      $region40: #{tpu_custom_call.1} parent=35 // pred_fallthru
        _
      %v192 = vld [vmem:[%s1] sm:$0xff]
      %v193 = vld [vmem:[%s1 + $0x8] sm:$0xff]
      %v194 = vld [vmem:[%s183] sm:$0xff]
      %v195 = vld [vmem:[%s183 + $0x8] sm:$0xff]
      %vm196 = vcmask 64512
      %v198 = vsel %vm196, %v192, 0
      %v201 = vsel %vm196, %v193, 0
      %203 = vmatprep.subr.mxu0 %v195
      %204 = vmatpush1.msra.mxu0 %v194
      %205 = vmatprep.subr.mxu0 0.0
      %206 = vmatpush1.msra.mxu0 0.0
      %207 = vmatprep.subr.mxu0 0.0
      %208 = vmatpush1.msra.mxu0 0.0
      %209 = vmatprep.subr.mxu0 0.0
      %210 = vmatpush1.msra.mxu0 0.0
      %211 = vmatprep.subr.mxu0 0.0
      %212 = vmatpush1.msra.mxu0 0.0
      %213 = vmatprep.subr.mxu0 0.0
      %214 = vmatpush1.msra.mxu0 0.0
      %215 = vmatprep.subr.mxu0 0.0
      %216 = vmatpush1.msra.mxu0 0.0
      %217 = vmatprep.subr.mxu0 0.0
      %218 = vmatpush1.msra.mxu0 0.0
      %219 = vmatprep.subr.mxu0 0.0
      %220 = vmatpush1.msra.mxu0 0.0
      %221 = vmatprep.subr.mxu0 0.0
      %222 = vmatpush1.msra.mxu0 0.0
      %223 = vmatprep.subr.mxu0 0.0
      %224 = vmatpush1.msra.mxu0 0.0
      %225 = vmatprep.subr.mxu0 0.0
      %226 = vmatpush1.msra.mxu0 0.0
      %227 = vmatprep.subr.mxu0 0.0
      %228 = vmatpush1.msra.mxu0 0.0
      %229 = vmatprep.subr.mxu0 0.0
      %230 = vmatpush1.msra.mxu0 0.0
      %231 = vmatprep.subr.mxu0 0.0
      %232 = vmatpush1.msra.mxu0 0.0
      %233 = vmatprep.subr.mxu0 0.0
      %234 = vmatpush1.msra.mxu0 0.0
      %235 = vmatprep.subr.mxu0 0.0
      %236 = vmatpush1.msra.mxu0 0.0
      %237 = vmatprep.subr.mxu0 0.0
      %238 = vmatpush1.msra.mxu0 0.0
      %239 = vmatprep.subr.mxu0 0.0
      %240 = vmatpush1.msra.mxu0 0.0
      %241 = vmatprep.subr.mxu0 0.0
      %242 = vmatpush1.msra.mxu0 0.0
      %243 = vmatprep.subr.mxu0 0.0
      %244 = vmatpush1.msra.mxu0 0.0
      %245 = vmatprep.subr.mxu0 0.0
      %246 = vmatpush1.msra.mxu0 0.0
      %247 = vmatprep.subr.mxu0 0.0
      %248 = vmatpush1.msra.mxu0 0.0
      %249 = vmatprep.subr.mxu0 0.0
      %250 = vmatpush1.msra.mxu0 0.0
      %251 = vmatprep.subr.mxu0 0.0
      %252 = vmatpush1.msra.mxu0 0.0
      %253 = vmatprep.subr.mxu0 0.0
      %254 = vmatpush1.msra.mxu0 0.0
      %255 = vmatprep.subr.mxu0 0.0
      %256 = vmatpush1.msra.mxu0 0.0
      %257 = vmatprep.subr.mxu0 0.0
      %258 = vmatpush1.msra.mxu0 0.0
      %259 = vmatprep.subr.mxu0 0.0
      %260 = vmatpush1.msra.mxu0 0.0
      %261 = vmatprep.subr.mxu0 0.0
      %262 = vmatpush1.msra.mxu0 0.0
      %263 = vmatprep.subr.mxu0 0.0
      %264 = vmatpush1.msra.mxu0 0.0
      %265 = vmatprep.subr.mxu0 0.0
      %266 = vmatpush1.msra.mxu0 0.0
      %267 = vmatprep.mubr.f32.mxu0 0.0
      %268 = vmatmul.mubr.f32.gmra.mrb[0].mxu0 %v198
      %v269 = vpop.f32.mrb[0].mxu0
      %v270 = vadd.f32 0.0, %v269
      %v271 = vpop.f32.mrb[0].mxu0
      %v272 = vadd.f32 0.0, %v271
      %273 = vmatprep.mubr.f32.mxu0 0.0
      %274 = vmatmul.mubr.f32.gmra.mrb[0].mxu0 %v201
      %v275 = vpop.f32.mrb[0].mxu0
      %v276 = vadd.f32 0.0, %v275
      %v277 = vpop.f32.mrb[0].mxu0
      %v278 = vadd.f32 0.0, %v277
      %279 = vdwg.mxu0
      %v280 = vld [vmem:[%s4] sm:$0xff]
      %v281 = vld [vmem:[%s4 + $0x8] sm:$0xff]
      %v282 = vadd.f32 %v270, %v272
      %283 = vadd.xlane.f32.xlu0 %v282
      %v284 = vpop.xlane.xlu0 %283
      %v285 = vadd.f32 %v276, %v278
      %286 = vadd.xlane.f32.xlu0 %v285
      %v287 = vpop.xlane.xlu0 %286
      %v288 = vadd.f32 %v280, %v284
      %v289 = vadd.f32 %v281, %v287
      %vm290 = vcmask 7168
      %291 = vst.msk [vmem:[%s4] sm:$0xff] %vm290, %v288
      %292 = vst.msk [vmem:[%s4 + $0x8] sm:$0xff] %vm290, %v289
      %v293 = vld [vmem:[%s4] sm:$0xff]
      %v294 = vld [vmem:[%s4 + $0x8] sm:$0xff]
      %v295 = vmul.f32 %v270, %v270
      %v296 = vmul.f32 %v272, %v272
      %v297 = vmul.f32 %v276, %v276
      %v298 = vmul.f32 %v278, %v278
      %v299 = vadd.f32 %v295, %v296
      %300 = vadd.xlane.f32.xlu0 %v299
      %v301 = vpop.xlane.xlu0 %300
      %v302 = vadd.f32 %v297, %v298
      %303 = vadd.xlane.f32.xlu0 %v302
      %v304 = vpop.xlane.xlu0 %303
      %v305 = vadd.f32 %v293, %v301
      %v306 = vadd.f32 %v294, %v304
      %vm307 = vcmask 15368
      %308 = vst.msk [vmem:[%s4] sm:$0xff] %vm307, %v305
      %309 = vst.msk [vmem:[%s4 + $0x8] sm:$0xff] %vm307, %v306
      %p310 = scmp.eq.s32.totalorder %s15, 2
      // Predicated region
      $region41: #{tpu_custom_call.1} parent=35 // pred_check
        %p311 = pneg %p310
      $region42: #{tpu_custom_call.1} parent=35 // pred_check_branch
        %313 = sbr.rel (%p311) target = $region44
      $region43: #{tpu_custom_call.1} parent=35 // pred_region
        %v314 = vld [vmem:[%s4] sm:$0xff]
        %v315 = vld [vmem:[%s4 + $0x8] sm:$0xff]
        %v316 = vmul.f32 %v314, 0.0015625
        %v317 = vmul.f32 %v315, 0.0015625
        %v318 = vmul.f32 %v316, %v316
        %v319 = vmul.f32 %v317, %v317
        %322 = vrot.lane.b32.xlu0 %v318, 1
        %v323 = vpop.permute.xlu0 %322
        %324 = vrot.lane.b32.xlu0 %v319, 1
        %v325 = vpop.permute.xlu0 %324
        %v328 = vsub.f32 %v316, %v323
        %v329 = vsub.f32 %v317, %v325
        %v330 = vmax.f32 %v328, 0.0
        %v331 = vmax.f32 %v329, 0.0
        %v332 = vld [vmem:[%s2] sm:$0xff]
        %v333 = vld [vmem:[%s2 + $0x8] sm:$0xff]
        %v334 = vadd.f32 %v330, 1e-05
        %v335 = vadd.f32 %v331, 1e-05
        %v336 = vrsqrt.pop %v334
        %v337 = vrsqrt.pop %v335
        %340 = vrot.lane.b32.xlu0 %v336, 127
        %v341 = vpop.permute.xlu0 %340
        %342 = vrot.lane.b32.xlu0 %v337, 127
        %v343 = vpop.permute.xlu0 %342
        %v346 = vmul.f32 %v332, %v341
        %v347 = vmul.f32 %v333, %v343
        %v348 = vld [vmem:[%s3] sm:$0xff]
        %v349 = vld [vmem:[%s3 + $0x8] sm:$0xff]
        %v350 = vmul.f32 %v316, %v346
        %v351 = vmul.f32 %v317, %v347
        %v352 = vsub.f32 %v348, %v350
        %v353 = vsub.f32 %v349, %v351
        %354 = vst.msk [vmem:[%s4] sm:$0xff] %vm290, %v346
        %355 = vst.msk [vmem:[%s4 + $0x8] sm:$0xff] %vm290, %v347
        %358 = vrot.lane.b32.xlu0 %v352, 1
        %v359 = vpop.permute.xlu0 %358
        %360 = vrot.lane.b32.xlu0 %v353, 1
        %v361 = vpop.permute.xlu0 %360
        %364 = vst.msk [vmem:[%s4] sm:$0xff] %vm307, %v359
        %365 = vst.msk [vmem:[%s4 + $0x8] sm:$0xff] %vm307, %v361
      $region44: #{tpu_custom_call.1} parent=35 // pred_fallthru
        _
      // Predicated region
      $region45: #{tpu_custom_call.1} parent=35 // pred_check
        %p366 = pneg %p117
      $region46: #{tpu_custom_call.1} parent=35 // pred_check_branch
        %368 = sbr.rel (%p366) target = $region48
      $region47: #{tpu_custom_call.1} parent=35 // pred_region
        _
      $region48: #{tpu_custom_call.1} parent=35 // pred_fallthru
        _
      // Predicated region
      $region49: #{tpu_custom_call.1} parent=35 // pred_check
        %p369 = pneg %p117
      $region50: #{tpu_custom_call.1} parent=35 // pred_check_branch
        %371 = sbr.rel (%p369) target = $region52
      $region51: #{tpu_custom_call.1} parent=35 // pred_region
        _
      $region52: #{tpu_custom_call.1} parent=35 // pred_fallthru
        _
    $region36: #{tpu_custom_call.1} parent=5 // pred_fallthru
      _
    %p372 = scmp.le.s32.totalorder 2, %s10
    // Predicated region
    $region53: #{tpu_custom_call.1} parent=5 // pred_check
      %p373 = pneg %p372
    $region54: #{tpu_custom_call.1} parent=5 // pred_check_branch
      %375 = sbr.rel (%p373) target = $region56
    $region55: #{tpu_custom_call.1} parent=5 // pred_region
      %s376 = ssub.s32 %s10, 2
    $region56: #{tpu_custom_call.1} parent=5 // pred_fallthru
      _
  $region6: #{tpu_custom_call.1} parent=0 // loop_footer
    %s14 = sadd.s32 1, %s10
  $region7: #{tpu_custom_call.1} parent=0 // loop_footer_branch
    %9 = sbr.rel target = $region3
  $region8: #{tpu_custom_call.1} parent=0 // loop_exit
    _

</llo_original>
